<compile_context>
chip_gen: v7x
topology: tpu7x:2x2x1
jax: 0.10.0
libtpu: 0.0.40
codegen_flags: <defaults>
</compile_context>

<pallas_src>
import functools

import jax
import jax.numpy as jnp
from jax.experimental import pallas as pl
from jax.experimental.pallas import tpu as pltpu

SUBLANE = 8    # vreg sublane count (second-last dim)


def _round_up(x, m):
    return (x + m - 1) // m * m


def _mlp_kernel(x_ref, w1_ref, b1_ref, w2_ref, b2_ref, out_ref):
    """One batch tile: q = relu(x @ W1 + b1) @ W2 + b2, fully VMEM-resident.

    Plain full-block store (no read-modify-write of out_ref) so the masked
    OOB behavior of the ragged last batch block stays well-defined.
    """
    x = x_ref[...]                                                   # (tm, I) f32
    h = jnp.dot(x, w1_ref[...],
                preferred_element_type=jnp.float32) + b1_ref[...]    # (tm, H) f32
    h = jnp.maximum(h, 0.0)                                          # ReLU (VPU)
    q = jnp.dot(h, w2_ref[...],
                preferred_element_type=jnp.float32) + b2_ref[...]    # (tm, A) f32
    out_ref[...] = q.astype(out_ref.dtype)


def _choose_tile(batch, block_rows):
    """Batch tile size: sublane-aligned, capped so large batches give >=2
    grid steps (lets v7x's two TensorCores both get work; free on v5e/v6e)."""
    half = _round_up(max(1, -(-batch // 2)), SUBLANE)
    return max(SUBLANE, min(block_rows, half))


@functools.partial(jax.jit, static_argnames=("block_rows",))
def network_forward(state, w1, b1, w2, b2, *, block_rows=4096):
    """state: (B, input_size) f32; returns q_values (B, nb_action) f32.

    w1: (input_size, 30), b1: (1, 30), w2: (30, nb_action), b2: (1, nb_action).
    """
    B, I = state.shape
    H = w1.shape[1]
    A = w2.shape[1]

    tm = _choose_tile(B, block_rows)
    grid = (pl.cdiv(B, tm),)

    return pl.pallas_call(
        _mlp_kernel,
        out_shape=jax.ShapeDtypeStruct((B, A), jnp.float32),
        grid=grid,
        in_specs=[
            # streamed per grid step (double-buffered by BlockSpec)
            pl.BlockSpec((tm, I), lambda i: (i, 0)),
            # constant index_map => weights/biases stay resident in VMEM
            pl.BlockSpec((I, H), lambda i: (0, 0)),
            pl.BlockSpec((1, H), lambda i: (0, 0)),
            pl.BlockSpec((H, A), lambda i: (0, 0)),
            pl.BlockSpec((1, A), lambda i: (0, 0)),
        ],
        out_specs=pl.BlockSpec((tm, A), lambda i: (i, 0)),
        compiler_params=pltpu.CompilerParams(
            # batch axis is embarrassingly parallel: 2x on v7x's dual TCs
            dimension_semantics=("parallel",),
        ),
    )(state, w1, b1, w2, b2)


def init_params(key, input_size, nb_action, hidden=30):
    """Deterministic init mirroring nn.Linear's U(-1/sqrt(fan_in), 1/sqrt(fan_in))."""
    k1, k2, k3, k4 = jax.random.split(key, 4)
    bound1 = 1.0 / jnp.sqrt(jnp.float32(input_size))
    bound2 = 1.0 / jnp.sqrt(jnp.float32(hidden))
    w1 = jax.random.uniform(k1, (input_size, hidden), jnp.float32, -bound1, bound1)
    b1 = jax.random.uniform(k2, (1, hidden), jnp.float32, -bound1, bound1)
    w2 = jax.random.uniform(k3, (hidden, nb_action), jnp.float32, -bound2, bound2)
    b2 = jax.random.uniform(k4, (1, nb_action), jnp.float32, -bound2, bound2)
    return w1, b1, w2, b2


def _reference(state, w1, b1, w2, b2):
    h = jnp.maximum(state @ w1 + b1, 0.0)
    return h @ w2 + b2


if __name__ == "__main__":
    key = jax.random.PRNGKey(0)
    k_params, k_small, k_big = jax.random.split(key, 3)

    input_size = 8      # small sensor state vector
    nb_action = 4

    w1, b1, w2, b2 = init_params(k_params, input_size, nb_action)

    # --- small-shape check (batch=2, matches the module's intended use) ---
    state_small = jax.random.normal(k_small, (2, input_size), jnp.float32)
    q_small = jax.block_until_ready(
        network_forward(state_small, w1, b1, w2, b2))
    assert q_small.shape == (2, nb_action)
    assert jnp.allclose(q_small, _reference(state_small, w1, b1, w2, b2),
                        atol=1e-5, rtol=1e-5)

    # --- batched check exercising grid > 1, ragged last block, resident weights ---
    state_big = jax.random.normal(k_big, (300, input_size), jnp.float32)
    q_big = jax.block_until_ready(
        network_forward(state_big, w1, b1, w2, b2))
    assert q_big.shape == (300, nb_action)
    assert jnp.allclose(q_big, _reference(state_big, w1, b1, w2, b2),
                        atol=1e-5, rtol=1e-5)

    print("KERNEL_OK")
</pallas_src>

<mosaic_0001>
module attributes {stable_mosaic.version = 11 : i64} {
  func.func @_mlp_kernel(%arg0: i32, %arg1: memref<8x8xf32, #tpu.memory_space<vmem>>, %arg2: memref<8x30xf32, #tpu.memory_space<vmem>>, %arg3: memref<1x30xf32, #tpu.memory_space<vmem>>, %arg4: memref<30x4xf32, #tpu.memory_space<vmem>>, %arg5: memref<1x4xf32, #tpu.memory_space<vmem>>, %arg6: memref<8x4xf32, #tpu.memory_space<vmem>>) attributes {dimension_semantics = [#tpu.dimension_semantics<parallel>], iteration_bounds = array<i64: 1>, scalar_prefetch = 0 : i64, scratch_operands = 0 : i64, tpu.core_type = #tpu.core_type<tc>, window_params = [{transform_indices = @transform_0, window_bounds = array<i64: 8, 8>}, {pipeline_mode = #tpu.pipeline_mode<synchronous>, transform_indices = @transform_1, window_bounds = array<i64: 8, 30>}, {pipeline_mode = #tpu.pipeline_mode<synchronous>, transform_indices = @transform_2, window_bounds = array<i64: 1, 30>}, {pipeline_mode = #tpu.pipeline_mode<synchronous>, transform_indices = @transform_3, window_bounds = array<i64: 30, 4>}, {pipeline_mode = #tpu.pipeline_mode<synchronous>, transform_indices = @transform_4, window_bounds = array<i64: 1, 4>}, {transform_indices = @transform_5, window_bounds = array<i64: 8, 4>}]} {
    %c0 = arith.constant 0 : index
    %c0_0 = arith.constant 0 : index
    %0 = vector.load %arg1[%c0, %c0_0] : memref<8x8xf32, #tpu.memory_space<vmem>>, vector<8x8xf32>
    %c0_1 = arith.constant 0 : index
    %c0_2 = arith.constant 0 : index
    %1 = vector.load %arg2[%c0_1, %c0_2] : memref<8x30xf32, #tpu.memory_space<vmem>>, vector<8x30xf32>
    %cst = arith.constant dense<0.000000e+00> : vector<8x30xf32>
    %2 = tpu.matmul %0, %1, %cst {dimension_numbers = #tpu.dot_dimension_numbers<[1], [0], [0], [1], [0, 0, 1, 1], [], []>} : vector<8x8xf32>, vector<8x30xf32>, vector<8x30xf32> -> vector<8x30xf32>
    %c0_3 = arith.constant 0 : index
    %c0_4 = arith.constant 0 : index
    %3 = vector.load %arg3[%c0_3, %c0_4] : memref<1x30xf32, #tpu.memory_space<vmem>>, vector<1x30xf32>
    %4 = vector.broadcast %3 : vector<1x30xf32> to vector<8x30xf32>
    %5 = arith.addf %2, %4 : vector<8x30xf32>
    %cst_5 = arith.constant 0.000000e+00 : f32
    %6 = vector.broadcast %cst_5 : f32 to vector<8x30xf32>
    %7 = arith.maximumf %5, %6 : vector<8x30xf32>
    %c0_6 = arith.constant 0 : index
    %c0_7 = arith.constant 0 : index
    %8 = vector.load %arg4[%c0_6, %c0_7] : memref<30x4xf32, #tpu.memory_space<vmem>>, vector<30x4xf32>
    %cst_8 = arith.constant dense<0.000000e+00> : vector<8x4xf32>
    %9 = tpu.matmul %7, %8, %cst_8 {dimension_numbers = #tpu.dot_dimension_numbers<[1], [0], [0], [1], [0, 0, 1, 1], [], []>} : vector<8x30xf32>, vector<30x4xf32>, vector<8x4xf32> -> vector<8x4xf32>
    %c0_9 = arith.constant 0 : index
    %c0_10 = arith.constant 0 : index
    %10 = vector.load %arg5[%c0_9, %c0_10] : memref<1x4xf32, #tpu.memory_space<vmem>>, vector<1x4xf32>
    %11 = vector.broadcast %10 : vector<1x4xf32> to vector<8x4xf32>
    %12 = arith.addf %9, %11 : vector<8x4xf32>
    %c0_11 = arith.constant 0 : index
    %c0_12 = arith.constant 0 : index
    %13 = vector.load %arg6[%c0_11, %c0_12] : memref<8x4xf32, #tpu.memory_space<vmem>>, vector<8x4xf32>
    tpu.vector_store %arg6[%c0_11, %c0_12], %12 {strides = array<i32>} : memref<8x4xf32, #tpu.memory_space<vmem>>, vector<8x4xf32>,
    return
  }
  func.func @transform_0(%arg0: i32) -> (i32, i32) {
    %c0_i32 = arith.constant 0 : i32
    %c0_i32_0 = arith.constant 0 : i32
    return %arg0, %c0_i32 : i32, i32
  }
  func.func @transform_1(%arg0: i32) -> (i32, i32) {
    %c0_i32 = arith.constant 0 : i32
    %c0_i32_0 = arith.constant 0 : i32
    %c0_i32_1 = arith.constant 0 : i32
    return %c0_i32, %c0_i32_0 : i32, i32
  }
  func.func @transform_2(%arg0: i32) -> (i32, i32) {
    %c0_i32 = arith.constant 0 : i32
    %c0_i32_0 = arith.constant 0 : i32
    %c0_i32_1 = arith.constant 0 : i32
    return %c0_i32, %c0_i32_0 : i32, i32
  }
  func.func @transform_3(%arg0: i32) -> (i32, i32) {
    %c0_i32 = arith.constant 0 : i32
    %c0_i32_0 = arith.constant 0 : i32
    %c0_i32_1 = arith.constant 0 : i32
    return %c0_i32, %c0_i32_0 : i32, i32
  }
  func.func @transform_4(%arg0: i32) -> (i32, i32) {
    %c0_i32 = arith.constant 0 : i32
    %c0_i32_0 = arith.constant 0 : i32
    %c0_i32_1 = arith.constant 0 : i32
    return %c0_i32, %c0_i32_0 : i32, i32
  }
  func.func @transform_5(%arg0: i32) -> (i32, i32) {
    %c0_i32 = arith.constant 0 : i32
    %c0_i32_0 = arith.constant 0 : i32
    return %arg0, %c0_i32 : i32, i32
  }
}

</mosaic_0001>

<llo_original>
// kernel: network_forward.1
$region0: #{network_forward.1}
  #allocation0 [shape = 'u32[]', space=smem, size = 0x4, offset = 0x4, fixed_abs, tag = 'smem constant byte address 0x4 - core index']
  #allocation1 [shape = 'u32[144,128]{1,0:T(1,128)}', space=vmem, size = 0x12000, scoped, tag = 'internal scratch']
  %s0 = inlined_call_operand.vmem [shape: f32[2,8], index: 0, kind: input, shape index: {}]
  %s1 = inlined_call_operand.vmem [shape: f32[8,30], index: 1, kind: input, shape index: {}]
  %s2 = inlined_call_operand.vmem [shape: f32[1,30], index: 2, kind: input, shape index: {}]
  %s3 = inlined_call_operand.vmem [shape: f32[30,4], index: 3, kind: input, shape index: {}]
  %s4 = inlined_call_operand.vmem [shape: f32[1,4], index: 4, kind: input, shape index: {}]
  %s5 = inlined_call_operand.hbm [shape: f32[2,4], index: 5, kind: output, shape index: {}]
  %s6 = sld [smem:[#allocation0]]
  $region30: #{network_forward.1} parent=0
    _
  %s8 = ssub.s32 1, %s6
  %s9 = scalar_select 0, %s8, %s6
  $region1: #{network_forward.1} parent=0
    #allocation2 [shape = 'u8[4096]{0}', space=vmem, size = 0x1000, scoped, tag = 'output window, operand 0, single buffered']
    #allocation3 [shape = 's32[1]{0}', space=sflag, size = 0x4, scoped, tag = 'scoped memory for network_forward.1']
    %10 = vsyncpa [#allocation3], 0
    // Predicated region
    $region2: #{network_forward.1} parent=1 // pred_check
      _
    $region3: #{network_forward.1} parent=1 // pred_check_branch
      %12 = sbr.rel (0) target = $region5
    $region4: #{network_forward.1} parent=1 // pred_region
      _
    $region5: #{network_forward.1} parent=1 // pred_fallthru
      _
    // Predicated region
    $region6: #{network_forward.1} parent=1 // pred_check
      _
    $region7: #{network_forward.1} parent=1 // pred_check_branch
      %14 = sbr.rel (0) target = $region9
    $region8: #{network_forward.1} parent=1 // pred_region
      _
    $region9: #{network_forward.1} parent=1 // pred_fallthru
      _
    // Predicated region
    $region10: #{network_forward.1} parent=1 // pred_check
      _
    $region11: #{network_forward.1} parent=1 // pred_check_branch
      %16 = sbr.rel (0) target = $region13
    $region12: #{network_forward.1} parent=1 // pred_region
      _
    $region13: #{network_forward.1} parent=1 // pred_fallthru
      _
    // Predicated region
    $region14: #{network_forward.1} parent=1 // pred_check
      _
    $region15: #{network_forward.1} parent=1 // pred_check_branch
      %18 = sbr.rel (0) target = $region17
    $region16: #{network_forward.1} parent=1 // pred_region
      _
    $region17: #{network_forward.1} parent=1 // pred_fallthru
      _
    // Predicated region
    $region18: #{network_forward.1} parent=1 // pred_check
      _
    $region19: #{network_forward.1} parent=1 // pred_check_branch
      %20 = sbr.rel (0) target = $region21
    $region20: #{network_forward.1} parent=1 // pred_region
      _
    $region21: #{network_forward.1} parent=1 // pred_fallthru
      _
    %v21 = vld [vmem:[%s0] sm:$0xff]
    %v22 = vld [vmem:[%s1] sm:$0xff]
    %v23 = vld [vmem:[%s2] sm:$0x1]
    %v25 = vlaneseq
    %v26 = vshrl.u32 %v25, 7
    %v27 = vsub.s32 0, %v26
    %v28 = vrot.slane %v23, %v27
    %vm30 = vcmask 64512
    %v32 = vsel %vm30, %v21, 0
    %34 = vmatprep.subr.mxu0 0.0
    %35 = vmatpush1.msra.mxu0 %v22
    %36 = vmatprep.subr.mxu0 0.0
    %37 = vmatpush1.msra.mxu0 0.0
    %38 = vmatprep.subr.mxu0 0.0
    %39 = vmatpush1.msra.mxu0 0.0
    %40 = vmatprep.subr.mxu0 0.0
    %41 = vmatpush1.msra.mxu0 0.0
    %42 = vmatprep.subr.mxu0 0.0
    %43 = vmatpush1.msra.mxu0 0.0
    %44 = vmatprep.subr.mxu0 0.0
    %45 = vmatpush1.msra.mxu0 0.0
    %46 = vmatprep.subr.mxu0 0.0
    %47 = vmatpush1.msra.mxu0 0.0
    %48 = vmatprep.subr.mxu0 0.0
    %49 = vmatpush1.msra.mxu0 0.0
    %50 = vmatprep.subr.mxu0 0.0
    %51 = vmatpush1.msra.mxu0 0.0
    %52 = vmatprep.subr.mxu0 0.0
    %53 = vmatpush1.msra.mxu0 0.0
    %54 = vmatprep.subr.mxu0 0.0
    %55 = vmatpush1.msra.mxu0 0.0
    %56 = vmatprep.subr.mxu0 0.0
    %57 = vmatpush1.msra.mxu0 0.0
    %58 = vmatprep.subr.mxu0 0.0
    %59 = vmatpush1.msra.mxu0 0.0
    %60 = vmatprep.subr.mxu0 0.0
    %61 = vmatpush1.msra.mxu0 0.0
    %62 = vmatprep.subr.mxu0 0.0
    %63 = vmatpush1.msra.mxu0 0.0
    %64 = vmatprep.subr.mxu0 0.0
    %65 = vmatpush1.msra.mxu0 0.0
    %66 = vmatprep.subr.mxu0 0.0
    %67 = vmatpush1.msra.mxu0 0.0
    %68 = vmatprep.subr.mxu0 0.0
    %69 = vmatpush1.msra.mxu0 0.0
    %70 = vmatprep.subr.mxu0 0.0
    %71 = vmatpush1.msra.mxu0 0.0
    %72 = vmatprep.subr.mxu0 0.0
    %73 = vmatpush1.msra.mxu0 0.0
    %74 = vmatprep.subr.mxu0 0.0
    %75 = vmatpush1.msra.mxu0 0.0
    %76 = vmatprep.subr.mxu0 0.0
    %77 = vmatpush1.msra.mxu0 0.0
    %78 = vmatprep.subr.mxu0 0.0
    %79 = vmatpush1.msra.mxu0 0.0
    %80 = vmatprep.subr.mxu0 0.0
    %81 = vmatpush1.msra.mxu0 0.0
    %82 = vmatprep.subr.mxu0 0.0
    %83 = vmatpush1.msra.mxu0 0.0
    %84 = vmatprep.subr.mxu0 0.0
    %85 = vmatpush1.msra.mxu0 0.0
    %86 = vmatprep.subr.mxu0 0.0
    %87 = vmatpush1.msra.mxu0 0.0
    %88 = vmatprep.subr.mxu0 0.0
    %89 = vmatpush1.msra.mxu0 0.0
    %90 = vmatprep.subr.mxu0 0.0
    %91 = vmatpush1.msra.mxu0 0.0
    %92 = vmatprep.subr.mxu0 0.0
    %93 = vmatpush1.msra.mxu0 0.0
    %94 = vmatprep.subr.mxu0 0.0
    %95 = vmatpush1.msra.mxu0 0.0
    %96 = vmatprep.subr.mxu0 0.0
    %97 = vmatpush1.msra.mxu0 0.0
    %98 = vmatprep.mubr.f32.mxu0 0.0
    %99 = vmatmul.mubr.f32.gmra.mrb[0].mxu0 %v32
    %v100 = vpop.f32.mrb[0].mxu0
    %v101 = vadd.f32 %v28, %v100
    %v102 = vpop.f32.mrb[0].mxu0
    %103 = vdwg.mxu0
    %v104 = vmax.f32 %v101, 0.0
    %v105 = vld [vmem:[%s3] sm:$0xff]
    %v106 = vld [vmem:[%s3 + $0x8] sm:$0xff]
    %v107 = vld [vmem:[%s3 + $0x10] sm:$0xff]
    %v108 = vld [vmem:[%s3 + $0x18] sm:$0x3f]
    %v109 = vld [vmem:[%s4] sm:$0x1]
    %v111 = vlaneseq
    %v112 = vshrl.u32 %v111, 7
    %v113 = vsub.s32 0, %v112
    %v114 = vrot.slane %v109, %v113
    %vm116 = vcmask 244736
    %v118 = vsel %vm116, %v104, 0
    %vm120 = vcmask 1045504
    %v122 = vsel %vm120, %v108, 0
    %124 = vmatprep.subr.mxu0 0.0
    %125 = vmatpush1.msra.mxu0 %v105
    %126 = vmatprep.subr.mxu0 0.0
    %127 = vmatpush1.msra.mxu0 %v106
    %128 = vmatprep.subr.mxu0 0.0
    %129 = vmatpush1.msra.mxu0 %v107
    %130 = vmatprep.subr.mxu0 0.0
    %131 = vmatpush1.msra.mxu0 %v122
    %132 = vmatprep.subr.mxu0 0.0
    %133 = vmatpush1.msra.mxu0 0.0
    %134 = vmatprep.subr.mxu0 0.0
    %135 = vmatpush1.msra.mxu0 0.0
    %136 = vmatprep.subr.mxu0 0.0
    %137 = vmatpush1.msra.mxu0 0.0
    %138 = vmatprep.subr.mxu0 0.0
    %139 = vmatpush1.msra.mxu0 0.0
    %140 = vmatprep.subr.mxu0 0.0
    %141 = vmatpush1.msra.mxu0 0.0
    %142 = vmatprep.subr.mxu0 0.0
    %143 = vmatpush1.msra.mxu0 0.0
    %144 = vmatprep.subr.mxu0 0.0
    %145 = vmatpush1.msra.mxu0 0.0
    %146 = vmatprep.subr.mxu0 0.0
    %147 = vmatpush1.msra.mxu0 0.0
    %148 = vmatprep.subr.mxu0 0.0
    %149 = vmatpush1.msra.mxu0 0.0
    %150 = vmatprep.subr.mxu0 0.0
    %151 = vmatpush1.msra.mxu0 0.0
    %152 = vmatprep.subr.mxu0 0.0
    %153 = vmatpush1.msra.mxu0 0.0
    %154 = vmatprep.subr.mxu0 0.0
    %155 = vmatpush1.msra.mxu0 0.0
    %156 = vmatprep.subr.mxu0 0.0
    %157 = vmatpush1.msra.mxu0 0.0
    %158 = vmatprep.subr.mxu0 0.0
    %159 = vmatpush1.msra.mxu0 0.0
    %160 = vmatprep.subr.mxu0 0.0
    %161 = vmatpush1.msra.mxu0 0.0
    %162 = vmatprep.subr.mxu0 0.0
    %163 = vmatpush1.msra.mxu0 0.0
    %164 = vmatprep.subr.mxu0 0.0
    %165 = vmatpush1.msra.mxu0 0.0
    %166 = vmatprep.subr.mxu0 0.0
    %167 = vmatpush1.msra.mxu0 0.0
    %168 = vmatprep.subr.mxu0 0.0
    %169 = vmatpush1.msra.mxu0 0.0
    %170 = vmatprep.subr.mxu0 0.0
    %171 = vmatpush1.msra.mxu0 0.0
    %172 = vmatprep.subr.mxu0 0.0
    %173 = vmatpush1.msra.mxu0 0.0
    %174 = vmatprep.subr.mxu0 0.0
    %175 = vmatpush1.msra.mxu0 0.0
    %176 = vmatprep.subr.mxu0 0.0
    %177 = vmatpush1.msra.mxu0 0.0
    %178 = vmatprep.subr.mxu0 0.0
    %179 = vmatpush1.msra.mxu0 0.0
    %180 = vmatprep.subr.mxu0 0.0
    %181 = vmatpush1.msra.mxu0 0.0
    %182 = vmatprep.subr.mxu0 0.0
    %183 = vmatpush1.msra.mxu0 0.0
    %184 = vmatprep.subr.mxu0 0.0
    %185 = vmatpush1.msra.mxu0 0.0
    %186 = vmatprep.subr.mxu0 0.0
    %187 = vmatpush1.msra.mxu0 0.0
    %188 = vmatprep.mubr.f32.mxu0 0.0
    %189 = vmatmul.mubr.f32.gmra.mrb[0].mxu0 %v118
    %v190 = vpop.f32.mrb[0].mxu0
    %v191 = vadd.f32 %v114, %v190
    %v192 = vpop.f32.mrb[0].mxu0
    %193 = vdwg.mxu0
    %vm194 = vcmask 31744
    %195 = vst.msk [vmem:[#allocation2] sm:$0xff] %vm194, %v191
    // Predicated region
    $region22: #{network_forward.1} parent=1 // pred_check
      _
    $region23: #{network_forward.1} parent=1 // pred_check_branch
      %197 = sbr.rel (0) target = $region25
    $region24: #{network_forward.1} parent=1 // pred_region
      %s199 = ssub.s32 128, 32
      %200 = vsyncadd [#allocation3], %s199
      %s201 = sshll.u32 [#allocation2], 4
      %s202 = int_to_ptr.vmem [resolvable:$true] %s201
      %207 = dma.vmem_to_hbm [thread:$0]  %s202, 32, %s5, [#allocation3], 32, 32, 2
    $region25: #{network_forward.1} parent=1 // pred_fallthru
      _
    // Predicated region
    $region26: #{network_forward.1} parent=1 // pred_check
      _
    $region27: #{network_forward.1} parent=1 // pred_check_branch
      %209 = sbr.rel (0) target = $region29
    $region28: #{network_forward.1} parent=1 // pred_region
      %210 = dma.done [#allocation3], 128
    $region29: #{network_forward.1} parent=1 // pred_fallthru
      _
    %211 = vsyncpa [#allocation3], 1

</llo_original>
